<compile_context>
chip_gen: v5e
topology: v5e:2x2
jax: 0.10.0
libtpu: 0.0.40
codegen_flags: <defaults>
</compile_context>

<pallas_src>
import jax
import jax.numpy as jnp
from jax.experimental import pallas as pl
from jax.experimental.pallas import tpu as pltpu


def _round_up(x, m):
    return ((x + m - 1) // m) * m


def _round_down(x, m):
    return (x // m) * m


def _patch_linear_kernel(x_ref, w_ref, o_ref):
    # x_ref: (tm, D), w_ref: (D, O), o_ref: (tm, O). f32 MXU accumulation.
    o_ref[...] = jnp.dot(
        x_ref[...], w_ref[...], preferred_element_type=jnp.float32
    ).astype(o_ref.dtype)


def _vmem_budget_and_limit():
    """Generation-aware VMEM sizing: generous on v5e/v6e (128 MiB physical),
    conservative on v7x (64 MiB) or when the hardware query fails."""
    try:
        cap = int(pltpu.get_tpu_info().vmem_capacity_bytes)
    except Exception:
        cap = 64 * 1024 * 1024
    if cap >= 100 * 1024 * 1024:                       # v5e / v6e
        return 56 * 1024 * 1024, 100 * 1024 * 1024
    return 30 * 1024 * 1024, 48 * 1024 * 1024          # v7x / unknown


def _pick_token_tile(n_tokens, d, o, in_bytes, out_bytes, budget_bytes,
                     weight_bufs):
    """Largest token tile whose working set fits the VMEM budget:
       2x X tile (lane-padded D) + weight_bufs x weight + 2x output tile
       + 1x f32 (tm, O) dot intermediate (Mosaic-internal, pre-cast).
       Capped to >= ~8 grid steps and aligned down to 256/128/16 rows."""
    d_lane = _round_up(d, 128)
    d_sub = _round_up(max(d, 16), 16)
    o_lane = _round_up(o, 128)
    w_bytes = weight_bufs * d_sub * o_lane * in_bytes
    per_row = (2 * d_lane * in_bytes          # input tile, double buffered
               + 2 * o_lane * out_bytes       # output tile, double buffered
               + o_lane * 4)                  # f32 dot intermediate, single
    tm = (budget_bytes - w_bytes) // per_row
    steps_cap = max(16, _round_down(pl.cdiv(n_tokens, 8), 16))  # >= ~8 steps
    n_cap = _round_up(n_tokens, 16)
    tm = max(16, min(int(tm), 4096, steps_cap, n_cap))
    for align in (256, 128, 16):
        if tm >= align:
            return _round_down(tm, align)
    return 16


def patch_embed_forward(x, weight, spatial_patch_size, temporal_patch_size, *,
                        compute_dtype=jnp.bfloat16, out_dtype=jnp.bfloat16):
    """x: (B, C, T, H, W); weight: (D, out_channels) with D = C*r*m*n
    (transpose of the PyTorch nn.Linear weight, row order (c, r, m, n)).
    Returns (B, T//r, H//m, W//n, out_channels) in out_dtype (bf16 default)."""
    B, C, T, H, W = x.shape
    r = temporal_patch_size
    m = n = spatial_patch_size
    assert T % r == 0 and H % m == 0 and W % n == 0
    t, h, w = T // r, H // m, W // n
    D = C * r * m * n
    O = weight.shape[1]
    assert weight.shape[0] == D

    # einops 'b c (t r) (h m) (w n) -> b t h w (c r m n)'; the downcast to
    # compute_dtype fuses into the transpose (one wide read, one narrow write).
    # TODO(synk): fuse this space-to-depth rearrange into the Pallas kernel.
    xr = x.reshape(B, C, t, r, h, m, w, n)
    xr = xr.transpose(0, 2, 4, 6, 1, 3, 5, 7)          # (B, t, h, w, C, r, m, n)
    N = B * t * h * w
    x_flat = xr.reshape(N, D).astype(compute_dtype)
    w_c = weight.astype(compute_dtype)

    in_bytes = jnp.dtype(compute_dtype).itemsize
    out_bytes = jnp.dtype(out_dtype).itemsize
    budget_bytes, vmem_limit = _vmem_budget_and_limit()

    # Resident weight: constant block index => never re-DMA'd. Drop to a single
    # buffer only when the default double buffer would waste real VMEM.
    o_lane = _round_up(O, 128)
    d_sub = _round_up(max(D, 16), 16)
    weight_bufs = 1 if 2 * d_sub * o_lane * in_bytes >= 8 * 1024 * 1024 else 2

    tm = _pick_token_tile(N, D, O, in_bytes, out_bytes, budget_bytes,
                          weight_bufs)
    grid = (pl.cdiv(N, tm),)

    if weight_bufs == 1:
        w_spec = pl.BlockSpec((D, O), lambda i: (0, 0),
                              pipeline_mode=pl.Buffered(1))
    else:
        w_spec = pl.BlockSpec((D, O), lambda i: (0, 0))

    cost = pl.CostEstimate(
        flops=2 * N * D * O,
        transcendentals=0,
        bytes_accessed=N * D * in_bytes + D * O * in_bytes + N * O * out_bytes,
    )

    y = pl.pallas_call(
        _patch_linear_kernel,
        out_shape=jax.ShapeDtypeStruct((N, O), out_dtype),
        grid_spec=pltpu.PrefetchScalarGridSpec(
            num_scalar_prefetch=0,
            grid=grid,
            in_specs=[
                pl.BlockSpec((tm, D), lambda i: (i, 0)),   # full-D (K) block
                w_spec,                                    # resident weight
            ],
            out_specs=pl.BlockSpec((tm, O), lambda i: (i, 0)),
        ),
        compiler_params=pltpu.CompilerParams(
            dimension_semantics=("parallel",),   # v7x: split grid across 2 TCs
            vmem_limit_bytes=vmem_limit,
        ),
        cost_estimate=cost,
    )(x_flat, w_c)

    return y.reshape(B, t, h, w, O)


if __name__ == "__main__":
    # Small config consistent with the module.
    B, C, T, H, W = 2, 3, 4, 16, 16
    spatial_patch_size = 2
    temporal_patch_size = 2
    out_channels = 32
    dim = C * spatial_patch_size * spatial_patch_size * temporal_patch_size

    key = jax.random.PRNGKey(0)
    kx, kw = jax.random.split(key)
    x = jax.random.normal(kx, (B, C, T, H, W), dtype=jnp.float32)
    # Deterministic synthetic weight stored as (dim, out_channels), i.e. the
    # transpose of PyTorch's nn.Linear weight of shape (out_channels, dim).
    bound = 1.0 / (dim ** 0.5)
    weight = jax.random.uniform(
        kw, (dim, out_channels), dtype=jnp.float32, minval=-bound, maxval=bound)

    # Plain-JAX f32 reference of Rearrange + bias-free Linear.
    t, h, w = (T // temporal_patch_size, H // spatial_patch_size,
               W // spatial_patch_size)
    xr = x.reshape(B, C, t, temporal_patch_size, h, spatial_patch_size,
                   w, spatial_patch_size)
    xr = xr.transpose(0, 2, 4, 6, 1, 3, 5, 7).reshape(B, t, h, w, dim)
    ref = jnp.einsum("bthwd,do->bthwo", xr, weight)

    # Default fast path: bf16 reads/writes, f32 MXU accumulation.
    out = patch_embed_forward(x, weight, spatial_patch_size, temporal_patch_size)
    out = jax.block_until_ready(out)
    assert out.shape == (B, t, h, w, out_channels)
    assert out.dtype == jnp.bfloat16
    assert jnp.allclose(out.astype(jnp.float32), ref, atol=5e-2, rtol=5e-2)

    # f32 parity path (kept for reference checks against the PyTorch module).
    out_f32 = patch_embed_forward(
        x, weight, spatial_patch_size, temporal_patch_size,
        compute_dtype=jnp.float32, out_dtype=jnp.float32)
    out_f32 = jax.block_until_ready(out_f32)
    assert out_f32.shape == (B, t, h, w, out_channels)
    assert out_f32.dtype == jnp.float32
    assert jnp.allclose(out_f32, ref, atol=2e-2, rtol=2e-2)

    print("KERNEL_OK")
</pallas_src>

<mosaic_0001>
module attributes {stable_mosaic.version = 11 : i64} {
  func.func @_patch_linear_kernel(%arg0: i32, %arg1: memref<32x24xbf16, #tpu.memory_space<vmem>>, %arg2: memref<24x32xbf16, #tpu.memory_space<vmem>>, %arg3: memref<32x32xbf16, #tpu.memory_space<vmem>>) attributes {dimension_semantics = [#tpu.dimension_semantics<parallel>], iteration_bounds = array<i64: 8>, scalar_prefetch = 0 : i64, scratch_operands = 0 : i64, tpu.core_type = #tpu.core_type<tc>, window_params = [{transform_indices = @transform_0, window_bounds = array<i64: 32, 24>}, {pipeline_mode = #tpu.pipeline_mode<synchronous>, transform_indices = @transform_1, window_bounds = array<i64: 24, 32>}, {transform_indices = @transform_2, window_bounds = array<i64: 32, 32>}]} {
    %c0 = arith.constant 0 : index
    %c0_0 = arith.constant 0 : index
    %0 = vector.load %arg1[%c0, %c0_0] : memref<32x24xbf16, #tpu.memory_space<vmem>>, vector<32x24xbf16>
    %c0_1 = arith.constant 0 : index
    %c0_2 = arith.constant 0 : index
    %1 = vector.load %arg2[%c0_1, %c0_2] : memref<24x32xbf16, #tpu.memory_space<vmem>>, vector<24x32xbf16>
    %cst = arith.constant dense<0.000000e+00> : vector<32x32xf32>
    %2 = tpu.matmul %0, %1, %cst {dimension_numbers = #tpu.dot_dimension_numbers<[1], [0], [0], [1], [0, 0, 1, 1], [], []>} : vector<32x24xbf16>, vector<24x32xbf16>, vector<32x32xf32> -> vector<32x32xf32>
    %3 = arith.truncf %2 : vector<32x32xf32> to vector<32x32xbf16>
    %c0_3 = arith.constant 0 : index
    %c0_4 = arith.constant 0 : index
    %4 = vector.load %arg3[%c0_3, %c0_4] : memref<32x32xbf16, #tpu.memory_space<vmem>>, vector<32x32xbf16>
    tpu.vector_store %arg3[%c0_3, %c0_4], %3 {strides = array<i32>} : memref<32x32xbf16, #tpu.memory_space<vmem>>, vector<32x32xbf16>,
    return
  }
  func.func @transform_0(%arg0: i32) -> (i32, i32) {
    %c0_i32 = arith.constant 0 : i32
    %c0_i32_0 = arith.constant 0 : i32
    return %arg0, %c0_i32 : i32, i32
  }
  func.func @transform_1(%arg0: i32) -> (i32, i32) {
    %c0_i32 = arith.constant 0 : i32
    %c0_i32_0 = arith.constant 0 : i32
    %c0_i32_1 = arith.constant 0 : i32
    return %c0_i32, %c0_i32_0 : i32, i32
  }
  func.func @transform_2(%arg0: i32) -> (i32, i32) {
    %c0_i32 = arith.constant 0 : i32
    %c0_i32_0 = arith.constant 0 : i32
    return %arg0, %c0_i32 : i32, i32
  }
}

</mosaic_0001>

<llo_original>
// kernel: tpu_custom_call.1
$region0: #{tpu_custom_call.1}
  #allocation0 [shape = 'u32[]', space=smem, size = 0x4, offset = 0x4, fixed_abs, tag = 'smem constant byte address 0x4 - core index']
  #allocation1 [shape = 'u32[72,128]{1,0:T(1,128)}', space=vmem, size = 0x9000, scoped, tag = 'internal scratch']
  %s0 = inlined_call_operand.vmem [shape: bf16[256,24], index: 0, kind: input, shape index: {}]
  %s1 = inlined_call_operand.vmem [shape: bf16[24,32], index: 1, kind: input, shape index: {}]
  %s2 = inlined_call_operand.vmem [shape: bf16[256,32], index: 2, kind: output, shape index: {}]
  %s3 = sld [smem:[#allocation0]]
  $region41: #{tpu_custom_call.1} parent=0
    _
  %s5 = ssub.s32 1, %s3
  %s6 = scalar_select 0, %s5, %s3
  loop: start=0, step=1, limit=10
  $region2: #{tpu_custom_call.1} parent=0 // loop_pre_header
    _
  $region3: #{tpu_custom_call.1} parent=0 // loop_header
    %s8 = sphi 0, %s12
    %p9 = scmp.ge.s32.totalorder %s8, 10
    %s18 = sphi 0, %s20
    %s21 = sphi 0, %s18
    %s22 = sphi 0, %s21
    %s38 = sphi 0, %s22
    %s42 = sphi 0, %s42
    %s44 = sphi 0, %s42
    %s45 = sphi 0, %s44
    %s59 = sphi 0, %s45
    %s65 = sphi 0, %s67
    %s68 = sphi 0, %s65
    %s69 = sphi 0, %s68
    %s85 = sphi 0, %s69
  $region4: #{tpu_custom_call.1} parent=0 // loop_header_branch
    %11 = sbr.rel (%p9) target = $region8
  $region5: #{tpu_custom_call.1} parent=0 // loop_body
    %s13 = ssub.s32 %s8, 1
    %s14 = ssub.s32 %s8, 2
    %s15 = sadd.s32 %s8, 1
    %s16 = ssub.s32 %s8, %s15
    %p17 = scmp.eq.s32.totalorder %s16, 0
    %s19 = sadd.s32 %s18, 1
    %s20 = scalar_select %p17, %s18, %s19
    %p23 = pneg %p17
    %p24 = scmp.eq.s32.totalorder %s8, 7
    %p25 = por %p23, %p24
    %p26 = scmp.ne.s32.totalorder %s18, %s21
    %p27 = scmp.eq.s32.totalorder %s8, 0
    %p28 = por %p26, %p27
    %p29 = scmp.ne.s32.totalorder %s18, %s21
    %p30 = scmp.eq.s32.totalorder %s13, 7
    %p31 = por %p29, %p30
    %p32 = scmp.ne.s32.totalorder %s21, %s22
    %p33 = scmp.eq.s32.totalorder %s13, 0
    %p34 = por %p32, %p33
    %p35 = scmp.ne.s32.totalorder %s21, %s22
    %p36 = scmp.eq.s32.totalorder %s14, 7
    %p37 = por %p35, %p36
    %p39 = scmp.ne.s32.totalorder %s22, %s38
    %p40 = scmp.eq.s32.totalorder %s14, 0
    %p41 = por %p39, %p40
    %s43 = sadd.s32 %s42, 1
    %p46 = scmp.eq.s32.totalorder %s8, 7
    %p47 = scmp.ne.s32.totalorder %s42, %s44
    %p48 = scmp.eq.s32.totalorder %s8, 0
    %p49 = por %p47, %p48
    %p50 = scmp.ne.s32.totalorder %s42, %s44
    %p51 = scmp.eq.s32.totalorder %s13, 7
    %p52 = por %p50, %p51
    %p53 = scmp.ne.s32.totalorder %s44, %s45
    %p54 = scmp.eq.s32.totalorder %s13, 0
    %p55 = por %p53, %p54
    %p56 = scmp.ne.s32.totalorder %s44, %s45
    %p57 = scmp.eq.s32.totalorder %s14, 7
    %p58 = por %p56, %p57
    %p60 = scmp.ne.s32.totalorder %s45, %s59
    %p61 = scmp.eq.s32.totalorder %s14, 0
    %p62 = por %p60, %p61
    %s63 = ssub.s32 %s8, %s15
    %p64 = scmp.eq.s32.totalorder %s63, 0
    %s66 = sadd.s32 %s65, 1
    %s67 = scalar_select %p64, %s65, %s66
    %p70 = pneg %p64
    %p71 = scmp.eq.s32.totalorder %s8, 7
    %p72 = por %p70, %p71
    %p73 = scmp.ne.s32.totalorder %s65, %s68
    %p74 = scmp.eq.s32.totalorder %s8, 0
    %p75 = por %p73, %p74
    %p76 = scmp.ne.s32.totalorder %s65, %s68
    %p77 = scmp.eq.s32.totalorder %s13, 7
    %p78 = por %p76, %p77
    %p79 = scmp.ne.s32.totalorder %s68, %s69
    %p80 = scmp.eq.s32.totalorder %s13, 0
    %p81 = por %p79, %p80
    %p82 = scmp.ne.s32.totalorder %s68, %s69
    %p83 = scmp.eq.s32.totalorder %s14, 7
    %p84 = por %p82, %p83
    %p86 = scmp.ne.s32.totalorder %s69, %s85
    %p87 = scmp.eq.s32.totalorder %s14, 0
    %p88 = por %p86, %p87
    %p89 = scmp.le.s32.totalorder 1, %s8
    %p90 = scmp.lt.s32.totalorder %s8, 9
    %p91 = pnand %p89, %p90
    %p92 = pneg %p91
    // Predicated region
    $region9: #{tpu_custom_call.1} parent=5 // pred_check
      _
    $region10: #{tpu_custom_call.1} parent=5 // pred_check_branch
      %94 = sbr.rel (%p91) target = $region12
    $region11: #{tpu_custom_call.1} parent=5 // pred_region
      %s95 = ssub.s32 %s8, 1
      // Predicated region
      $region13: #{tpu_custom_call.1} parent=11 // pred_check
        %p96 = pneg %p55
      $region14: #{tpu_custom_call.1} parent=11 // pred_check_branch
        %98 = sbr.rel (%p96) target = $region16
      $region15: #{tpu_custom_call.1} parent=11 // pred_region
        _
      $region16: #{tpu_custom_call.1} parent=11 // pred_fallthru
        _
    $region12: #{tpu_custom_call.1} parent=5 // pred_fallthru
      _
    %p99 = scmp.lt.s32.totalorder %s8, 8
    // Predicated region
    $region17: #{tpu_custom_call.1} parent=5 // pred_check
      %p100 = pneg %p99
    $region18: #{tpu_custom_call.1} parent=5 // pred_check_branch
      %102 = sbr.rel (%p100) target = $region20
    $region19: #{tpu_custom_call.1} parent=5 // pred_region
      // Predicated region
      $region21: #{tpu_custom_call.1} parent=19 // pred_check
        %p103 = pneg %p28
      $region22: #{tpu_custom_call.1} parent=19 // pred_check_branch
        %105 = sbr.rel (%p103) target = $region24
      $region23: #{tpu_custom_call.1} parent=19 // pred_region
        %s106 = smul.u32 4, %s8
        %p107 = scmp.lt.s32.totalorder %s106, 31
        %s108 = scalar_select %p107, %s106, 31
        %s109 = smul.addr %s108, 4
        %s110 = scalar_lea.vmem %s0, %s109
        %s111 = smul.u32 4, %s8
      $region24: #{tpu_custom_call.1} parent=19 // pred_fallthru
        _
    $region20: #{tpu_custom_call.1} parent=5 // pred_fallthru
      _
    %p112 = scmp.le.s32.totalorder 1, %s8
    %p113 = scmp.lt.s32.totalorder %s8, 9
    %p114 = pnand %p112, %p113
    %p115 = pneg %p114
    // Predicated region
    $region25: #{tpu_custom_call.1} parent=5 // pred_check
      _
    $region26: #{tpu_custom_call.1} parent=5 // pred_check_branch
      %117 = sbr.rel (%p114) target = $region28
    $region27: #{tpu_custom_call.1} parent=5 // pred_region
      %s118 = ssub.s32 %s8, 1
      %s119 = smul.u32 4, %s13
      %p120 = scmp.lt.s32.totalorder %s119, 31
      %s121 = scalar_select %p120, %s119, 31
      %s122 = smul.addr %s121, 4
      %s123 = scalar_lea.vmem %s0, %s122
      %p124 = pneg %p34
      %p125 = pneg %p31
      %p126 = pneg %p55
      %p127 = pneg %p52
      %p128 = pneg %p81
      %p129 = pneg %p78
      %s130 = smul.u32 4, %s13
      %p131 = scmp.lt.s32.totalorder %s130, 31
      %s132 = scalar_select %p131, %s130, 31
      %s133 = smul.addr %s132, 4
      %s134 = scalar_lea.vmem %s2, %s133
      %s135 = smul.u32 4, %s13
      %p136 = scmp.lt.s32.totalorder %s135, 31
      %s137 = scalar_select %p136, %s135, 31
      %s138 = smul.addr %s137, 4
      %s139 = scalar_lea.vmem %s0, %s138
      %s140 = smul.u32 4, %s13
      %s141 = smul.u32 4, %s13
      %p142 = scmp.lt.s32.totalorder %s141, 31
      %s143 = scalar_select %p142, %s141, 31
      %s144 = smul.addr %s143, 4
      %s145 = scalar_lea.vmem %s2, %s144
      %s146 = smul.u32 4, %s13
      %v148 = vld [vmem:[%s139] sm:$0xf]
      %v149 = vld [vmem:[%s139 + $0x4] sm:$0xf]
      %v150 = vld [vmem:[%s139 + $0x8] sm:$0xf]
      %v151 = vld [vmem:[%s139 + $0xc] sm:$0xf]
      %v152 = vld [vmem:[%s1] sm:$0xf]
      %v153 = vld [vmem:[%s1 + $0x4] sm:$0xf]
      %v154 = vld [vmem:[%s1 + $0x8] sm:$0xf]
      %v159 = vunpack.c.l.b16 %v148
      %v160 = vunpack.c.l.b16 %v149
      %v161 = vunpack.c.l.b16 %v150
      %v162 = vunpack.c.l.b16 %v151
      %v163 = vpack.c.b16 %v160, %v159
      %v164 = vpack.c.b16 %v162, %v161
      %v168 = vunpack.c.l.b16 %v152
      %v169 = vunpack.c.l.b16 %v153
      %v170 = vunpack.c.l.b16 %v154
      %v171 = vpack.c.b16 %v169, %v168
      %v172 = vpack.c.b16 %v170, %v170
      %vm174 = vcmask 195584
      %v176 = vsel %vm174, %v163, 0
      %v179 = vsel %vm174, %v164, 0
      %vm181 = vcmask 1043456
      %v183 = vsel %vm181, %v172, 0
      %185 = vmatpush.bf16.msra.mxu0 0
      %186 = vmatpush.bf16.msra.mxu0 0
      %187 = vmatpush.bf16.msra.mxu0 0
      %188 = vmatpush.bf16.msra.mxu0 0
      %189 = vmatpush.bf16.msra.mxu0 0
      %190 = vmatpush.bf16.msra.mxu0 0
      %191 = vmatpush.bf16.msra.mxu0 %v183
      %192 = vmatpush.bf16.msra.mxu0 %v171
      %193 = vmatmul.bf16.gmra.mxu0 %v176
      %v194 = vpop.f32.mrf.mxu0
      %v195 = vadd.f32 0.0, %v194
      %v196 = vpop.f32.mrf.mxu0
      %v197 = vadd.f32 0.0, %v196
      %198 = vmatmul.bf16.gmra.mxu0 %v179
      %v199 = vpop.f32.mrf.mxu0
      %v200 = vadd.f32 0.0, %v199
      %v201 = vpop.f32.mrf.mxu0
      %v202 = vadd.f32 0.0, %v201
      %203 = vdwg.mxu0
      %v204 = vpack.c.bf16 %v195, %v195
      %v205 = vpack.c.bf16 %v197, %v197
      %v206 = vpack.c.bf16 %v200, %v200
      %v207 = vpack.c.bf16 %v202, %v202
      %vm208 = vcmask 257024
      %209 = vst.msk [vmem:[%s145] sm:$0xf] %vm208, %v204
      %210 = vst.msk [vmem:[%s145 + $0x4] sm:$0xf] %vm208, %v205
      %211 = vst.msk [vmem:[%s145 + $0x8] sm:$0xf] %vm208, %v206
      %212 = vst.msk [vmem:[%s145 + $0xc] sm:$0xf] %vm208, %v207
      %s213 = smul.u32 4, %s13
      %p214 = scmp.lt.s32.totalorder %s213, 31
      %s215 = scalar_select %p214, %s213, 31
      %s216 = smul.addr %s215, 4
      %s217 = scalar_lea.vmem %s2, %s216
      // Predicated region
      $region29: #{tpu_custom_call.1} parent=27 // pred_check
        %p218 = pneg %p78
      $region30: #{tpu_custom_call.1} parent=27 // pred_check_branch
        %220 = sbr.rel (%p218) target = $region32
      $region31: #{tpu_custom_call.1} parent=27 // pred_region
        %s221 = smul.u32 4, %s13
      $region32: #{tpu_custom_call.1} parent=27 // pred_fallthru
        _
    $region28: #{tpu_custom_call.1} parent=5 // pred_fallthru
      _
    %p222 = scmp.le.s32.totalorder 2, %s8
    // Predicated region
    $region33: #{tpu_custom_call.1} parent=5 // pred_check
      %p223 = pneg %p222
    $region34: #{tpu_custom_call.1} parent=5 // pred_check_branch
      %225 = sbr.rel (%p223) target = $region36
    $region35: #{tpu_custom_call.1} parent=5 // pred_region
      %s226 = ssub.s32 %s8, 2
      // Predicated region
      $region37: #{tpu_custom_call.1} parent=35 // pred_check
        %p227 = pneg %p84
      $region38: #{tpu_custom_call.1} parent=35 // pred_check_branch
        %229 = sbr.rel (%p227) target = $region40
      $region39: #{tpu_custom_call.1} parent=35 // pred_region
        %s230 = smul.u32 4, %s14
        %p231 = scmp.lt.s32.totalorder %s230, 31
        %s232 = scalar_select %p231, %s230, 31
        %s233 = smul.addr %s232, 4
        %s234 = scalar_lea.vmem %s2, %s233
      $region40: #{tpu_custom_call.1} parent=35 // pred_fallthru
        _
    $region36: #{tpu_custom_call.1} parent=5 // pred_fallthru
      _
  $region6: #{tpu_custom_call.1} parent=0 // loop_footer
    %s12 = sadd.s32 1, %s8
  $region7: #{tpu_custom_call.1} parent=0 // loop_footer_branch
    %7 = sbr.rel target = $region3
  $region8: #{tpu_custom_call.1} parent=0 // loop_exit
    _

</llo_original>
